<compile_context>
chip_gen: v5e
topology: v5e:2x2
jax: 0.10.0
libtpu: 0.0.40
codegen_flags: <defaults>
</compile_context>

<pallas_src>
import functools

import jax
import jax.numpy as jnp
from jax.experimental import pallas as pl
from jax.experimental.pallas import tpu as pltpu

LANES = 128                 # lane width (last dim of every tile)
DEFAULT_BLOCK_ROWS = 2048   # 2048 x 128 f32 = 1 MiB / input / pipeline buffer


def _cdiv(a, b):
    return -(-a // b)


def _round_up(x, m):
    return _cdiv(x, m) * m


def _num_tensorcores():
    """2 on dual-TensorCore chips (v7x); 1 on v5e/v6e (single TC per chip)."""
    try:
        kind = jax.devices()[0].device_kind.lower()
    except Exception:  # pragma: no cover - be conservative if query fails
        return 1
    return 2 if ("v7" in kind or "tpu7" in kind) else 1


def _nnpu_tanh_sum_kernel(p_ref, n_ref, op_ref, on_ref, accp_ref, accn_ref, *,
                          nblk_p, nblk_n, vrl_p, vrl_n, mask_p, mask_n, inner):
    c = pl.program_id(0)            # core-split axis
    i = pl.program_id(1)            # row-tile axis within this core
    blk = c * inner + i             # global row-tile index

    @pl.when(i == 0)
    def _():
        accp_ref[...] = jnp.zeros_like(accp_ref)
        accn_ref[...] = jnp.zeros_like(accn_ref)

    def accumulate(x_ref, acc_ref, nblk, valid_rows_last, needs_mask):
        last = nblk - 1
        tm = x_ref.shape[0]

        def add_partial(mask_rows):
            # sigmoid(x) = 0.5*(tanh(0.5*x) + 1): accumulate only tanh(0.5*x);
            # the 0.5*(..) + 0.5*count affine correction runs in the epilogue.
            t = jnp.tanh(0.5 * x_ref[...].astype(jnp.float32))
            if mask_rows:
                # Sublane-only row mask for the final partial block (the ragged
                # lane tail was already split off in the wrapper). jnp.where is
                # a select, so garbage/NaN in OOB rows cannot propagate.
                row = jax.lax.broadcasted_iota(jnp.int32, (tm, LANES), 0)
                t = jnp.where(row < valid_rows_last, t, 0.0)
            # (tm,128) -> (tm//8,8,128) matches native sublane tiling, so this
            # reduce is pure VPU vreg adds into the resident (8,128) scratch —
            # no per-step XLU sublane collapse, no single-sublane store.
            acc_ref[...] += jnp.sum(t.reshape(tm // 8, 8, LANES), axis=0)

        if needs_mask:
            @pl.when(blk < last)
            def _():
                add_partial(False)

            @pl.when(blk == last)
            def _():
                add_partial(True)
        else:
            @pl.when(blk <= last)
            def _():
                add_partial(False)
        # blk > last: this input is exhausted on this core; its clamped
        # index_map keeps re-presenting its final block, so nothing new is
        # fetched from HBM and nothing is accumulated.

    accumulate(p_ref, accp_ref, nblk_p, vrl_p, mask_p)
    accumulate(n_ref, accn_ref, nblk_n, vrl_n, mask_n)

    # Collapse 8 sublanes -> 1 and write the (1,1,128) output block once.
    @pl.when(i == inner - 1)
    def _():
        op_ref[...] = jnp.sum(accp_ref[...], axis=0, keepdims=True)[None]
        on_ref[...] = jnp.sum(accn_ref[...], axis=0, keepdims=True)[None]


def _as_rows(x, block_rows):
    """Split x into a lane-dense [rows,128] kernel view + a tiny jnp tail.

    Returns (x2, n_total, n_main, tail, tm, nblk, valid_rows_last, needs_mask).
    Copy-free whenever x.size is a multiple of 128 (the common case).
    """
    flat = jnp.ravel(x)                     # contiguous flatten: free
    n = int(flat.shape[0])
    rows = n // LANES
    n_main = rows * LANES
    tail = None if n_main == n else flat[n_main:]          # <= 127 elements

    if rows == 0:
        # Too small to stream: dummy all-masked block; epilogue handles it all.
        x2 = jnp.zeros((8, LANES), flat.dtype)
        tm, nblk, valid_last = 8, 1, 0
        return x2, n, 0, tail, tm, nblk, valid_last, True

    # TODO(synk): for ragged n the aligned-prefix slice may still cost one XLA
    # copy; the 128-divisible case streams the original buffer with no copy.
    main = flat if n_main == n else flat[:n_main]
    x2 = main.reshape(rows, LANES)                          # contiguous: free
    tm = min(block_rows, _round_up(rows, 8))                # multiple of 8
    nblk = _cdiv(rows, tm)
    valid_last = rows - (nblk - 1) * tm
    needs_mask = valid_last != tm
    return x2, n, n_main, tail, tm, nblk, valid_last, needs_mask


def oversampled_nnpu_loss(output_p, output_n, prior, prior_prime=None, *,
                          block_rows=DEFAULT_BLOCK_ROWS):
    """Pallas equivalent of OversampledNNPULossFunc.forward.

    `prior_prime` is accepted but ignored: the reference forward overwrites it
    with 0.5 (surprising but faithful to the PyTorch module). Returns a scalar
    float32 cost.
    """
    block_rows = max(8, _round_up(int(block_rows), 8))
    p2, n_p, nmain_p, tail_p, tm_p, nblk_p, vrl_p, mask_p = _as_rows(output_p, block_rows)
    n2, n_n, nmain_n, tail_n, tm_n, nblk_n, vrl_n, mask_n = _as_rows(output_n, block_rows)
    if n_p == 0 or n_n == 0:
        raise ValueError("output_p and output_n must both be non-empty "
                         "(torch.mean of an empty tensor is NaN).")

    total_blk = max(nblk_p, nblk_n)
    ncores = min(_num_tensorcores(), total_blk)   # don't split a single block
    inner = _cdiv(total_blk, ncores)

    def clamped_map(nblk):
        last = nblk - 1
        return lambda c, i: (jnp.minimum(c * inner + i, last), 0)

    kernel = functools.partial(
        _nnpu_tanh_sum_kernel,
        nblk_p=nblk_p, nblk_n=nblk_n, vrl_p=vrl_p, vrl_n=vrl_n,
        mask_p=mask_p, mask_n=mask_n, inner=inner)

    def call(dim_sem):
        return pl.pallas_call(
            kernel,
            out_shape=(
                jax.ShapeDtypeStruct((ncores, 1, LANES), jnp.float32),
                jax.ShapeDtypeStruct((ncores, 1, LANES), jnp.float32),
            ),
            grid=(ncores, inner),
            in_specs=[
                pl.BlockSpec((tm_p, LANES), clamped_map(nblk_p)),
                pl.BlockSpec((tm_n, LANES), clamped_map(nblk_n)),
            ],
            out_specs=(
                pl.BlockSpec((1, 1, LANES), lambda c, i: (c, 0, 0)),
                pl.BlockSpec((1, 1, LANES), lambda c, i: (c, 0, 0)),
            ),
            scratch_shapes=[
                pltpu.VMEM((8, LANES), jnp.float32),
                pltpu.VMEM((8, LANES), jnp.float32),
            ],
            compiler_params=pltpu.CompilerParams(dimension_semantics=dim_sem),
        )(p2, n2)

    # On v7x, ask for a real 2-TensorCore shard of axis 0 (CORE_PARALLEL);
    # fall back to plain "parallel" if this Mosaic build rejects it. On 1-TC
    # chips the axis has size 1 and is just "arbitrary".
    if ncores > 1:
        arb = getattr(pltpu, "ARBITRARY", "arbitrary")
        core_par = getattr(pltpu, "CORE_PARALLEL", None)
        candidates = ([(core_par, arb)] if core_par is not None else [])
        candidates.append(("parallel", "arbitrary"))
    else:
        candidates = [("arbitrary", "arbitrary")]

    part_p = part_n = None
    err = None
    for sem in candidates:
        try:
            part_p, part_n = call(tuple(sem))
            break
        except Exception as e:   # pragma: no cover - semantics fallback
            err = e
    if part_p is None:
        raise err

    def mean_sigmoid(part, n_main, tail, n_total):
        # kernel accumulated sum(tanh(0.5*x)) over the n_main streamed elements
        s = 0.5 * jnp.sum(part) + 0.5 * jnp.float32(n_main)
        if tail is not None:     # <= 127 leftover elements, plain jnp
            s = s + jnp.sum(jax.nn.sigmoid(tail.astype(jnp.float32)))
        return s / jnp.float32(n_total)

    mean_p = mean_sigmoid(part_p, nmain_p, tail_p, n_p)
    mean_n = mean_sigmoid(part_n, nmain_n, tail_n, n_n)

    prior = jnp.asarray(prior, jnp.float32)
    prior_prime = jnp.float32(0.5)          # forced, as in the PyTorch forward
    coef = (1.0 - prior_prime) / (1.0 - prior)
    return coef * mean_n - coef * prior * mean_p


if __name__ == "__main__":
    key = jax.random.PRNGKey(0)
    kp, kn, kp2, kn2, kp3, kn3 = jax.random.split(key, 6)

    def reference(op, on, prior):
        coef = (1.0 - 0.5) / (1.0 - prior)
        return (coef * jnp.mean(jax.nn.sigmoid(on))
                - coef * prior * jnp.mean(jax.nn.sigmoid(op)))

    # Case 1: lane-aligned sizes (copy-free fast path).
    output_p = jax.random.normal(kp, (2, 4, 16, 16), jnp.float32)   # 2048 logits
    output_n = jax.random.normal(kn, (2, 4, 16, 24), jnp.float32)   # 3072 logits
    prior = 0.3
    cost = jax.block_until_ready(oversampled_nnpu_loss(output_p, output_n, prior, 0.7))
    ref = reference(output_p, output_n, prior)
    assert jnp.allclose(cost, ref, atol=1e-5, rtol=1e-5), (cost, ref)

    # Case 2: ragged sizes (epilogue-tail path, sub-128 positive set, masked
    # final row block for the negative set).
    output_p2 = jax.random.normal(kp2, (7, 13), jnp.float32)        # 91 logits
    output_n2 = jax.random.normal(kn2, (300,), jnp.float32)         # 300 logits
    cost2 = jax.block_until_ready(oversampled_nnpu_loss(output_p2, output_n2, 0.45, 0.7))
    ref2 = reference(output_p2, output_n2, 0.45)
    assert jnp.allclose(cost2, ref2, atol=1e-5, rtol=1e-5), (cost2, ref2)

    # Case 3: multi-block streaming with unequal block counts (nblk_p << nblk_n
    # and total blocks not divisible by the core split) using small tiles.
    output_p3 = jax.random.normal(kp3, (16, 128), jnp.float32)      # 2048 logits
    output_n3 = jax.random.normal(kn3, (80, 128), jnp.float32)      # 10240 logits
    cost3 = jax.block_until_ready(
        oversampled_nnpu_loss(output_p3, output_n3, 0.2, 0.7, block_rows=16))
    ref3 = reference(output_p3, output_n3, 0.2)
    assert jnp.allclose(cost3, ref3, atol=1e-5, rtol=1e-5), (cost3, ref3)

    print("KERNEL_OK")
</pallas_src>

<mosaic_0001>
module attributes {stable_mosaic.version = 11 : i64} {
  func.func @_nnpu_tanh_sum_kernel(%arg0: i32, %arg1: i32, %arg2: memref<16x128xf32, #tpu.memory_space<vmem>>, %arg3: memref<24x128xf32, #tpu.memory_space<vmem>>, %arg4: memref<1x1x128xf32, #tpu.memory_space<vmem>>, %arg5: memref<1x1x128xf32, #tpu.memory_space<vmem>>, %arg6: memref<8x128xf32, #tpu.memory_space<vmem>>, %arg7: memref<8x128xf32, #tpu.memory_space<vmem>>) attributes {dimension_semantics = [#tpu.dimension_semantics<arbitrary>, #tpu.dimension_semantics<arbitrary>], iteration_bounds = array<i64: 1, 1>, scalar_prefetch = 0 : i64, scratch_operands = 2 : i64, tpu.core_type = #tpu.core_type<tc>, window_params = [{transform_indices = @transform_0, window_bounds = array<i64: 16, 128>}, {transform_indices = @transform_1, window_bounds = array<i64: 24, 128>}, {transform_indices = @transform_2, window_bounds = array<i64: 1, 1, 128>}, {transform_indices = @transform_3, window_bounds = array<i64: 1, 1, 128>}]} {
    %c1_i32 = arith.constant 1 : i32
    %0 = arith.muli %arg0, %c1_i32 : i32
    %1 = arith.addi %0, %arg1 : i32
    %c0_i32 = arith.constant 0 : i32
    %2 = arith.cmpi eq, %arg1, %c0_i32 : i32
    %3 = arith.extui %2 : i1 to i32
    %c0_i32_0 = arith.constant 0 : i32
    %4 = arith.cmpi ne, %3, %c0_i32_0 : i32
    scf.if %4 {
      %cst = arith.constant 0.000000e+00 : f32
      %14 = vector.broadcast %cst : f32 to vector<8x128xf32>
      %c0 = arith.constant 0 : index
      %c0_7 = arith.constant 0 : index
      %15 = vector.load %arg6[%c0, %c0_7] : memref<8x128xf32, #tpu.memory_space<vmem>>, vector<8x128xf32>
      tpu.vector_store %arg6[%c0, %c0_7], %14 {strides = array<i32>} : memref<8x128xf32, #tpu.memory_space<vmem>>, vector<8x128xf32>,
      %cst_8 = arith.constant 0.000000e+00 : f32
      %16 = vector.broadcast %cst_8 : f32 to vector<8x128xf32>
      %c0_9 = arith.constant 0 : index
      %c0_10 = arith.constant 0 : index
      %17 = vector.load %arg7[%c0_9, %c0_10] : memref<8x128xf32, #tpu.memory_space<vmem>>, vector<8x128xf32>
      tpu.vector_store %arg7[%c0_9, %c0_10], %16 {strides = array<i32>} : memref<8x128xf32, #tpu.memory_space<vmem>>, vector<8x128xf32>,
    } else {
    }
    %c0_i32_1 = arith.constant 0 : i32
    %5 = arith.cmpi sle, %1, %c0_i32_1 : i32
    %6 = arith.extui %5 : i1 to i32
    %c0_i32_2 = arith.constant 0 : i32
    %7 = arith.cmpi ne, %6, %c0_i32_2 : i32
    scf.if %7 {
      %c0 = arith.constant 0 : index
      %c0_7 = arith.constant 0 : index
      %14 = vector.load %arg2[%c0, %c0_7] : memref<16x128xf32, #tpu.memory_space<vmem>>, vector<16x128xf32>
      %cst = arith.constant 5.000000e-01 : f32
      %15 = vector.broadcast %cst : f32 to vector<16x128xf32>
      %16 = arith.mulf %15, %14 : vector<16x128xf32>
      %17 = math.tanh %16 : vector<16x128xf32>
      %c0_8 = arith.constant 0 : index
      %c0_9 = arith.constant 0 : index
      %18 = vector.load %arg6[%c0_8, %c0_9] : memref<8x128xf32, #tpu.memory_space<vmem>>, vector<8x128xf32>
      %19 = vector.shape_cast %17 : vector<16x128xf32> to vector<2x8x128xf32>
      %cst_10 = arith.constant dense<0.000000e+00> : vector<8x128xf32>
      %20 = vector.multi_reduction <add>, %19, %cst_10 [0] : vector<2x8x128xf32> to vector<8x128xf32>
      %21 = arith.addf %18, %20 : vector<8x128xf32>
      %c0_11 = arith.constant 0 : index
      %c0_12 = arith.constant 0 : index
      %22 = vector.load %arg6[%c0_11, %c0_12] : memref<8x128xf32, #tpu.memory_space<vmem>>, vector<8x128xf32>
      tpu.vector_store %arg6[%c0_11, %c0_12], %21 {strides = array<i32>} : memref<8x128xf32, #tpu.memory_space<vmem>>, vector<8x128xf32>,
    } else {
    }
    %c0_i32_3 = arith.constant 0 : i32
    %8 = arith.cmpi sle, %1, %c0_i32_3 : i32
    %9 = arith.extui %8 : i1 to i32
    %c0_i32_4 = arith.constant 0 : i32
    %10 = arith.cmpi ne, %9, %c0_i32_4 : i32
    scf.if %10 {
      %c0 = arith.constant 0 : index
      %c0_7 = arith.constant 0 : index
      %14 = vector.load %arg3[%c0, %c0_7] : memref<24x128xf32, #tpu.memory_space<vmem>>, vector<24x128xf32>
      %cst = arith.constant 5.000000e-01 : f32
      %15 = vector.broadcast %cst : f32 to vector<24x128xf32>
      %16 = arith.mulf %15, %14 : vector<24x128xf32>
      %17 = math.tanh %16 : vector<24x128xf32>
      %c0_8 = arith.constant 0 : index
      %c0_9 = arith.constant 0 : index
      %18 = vector.load %arg7[%c0_8, %c0_9] : memref<8x128xf32, #tpu.memory_space<vmem>>, vector<8x128xf32>
      %19 = vector.shape_cast %17 : vector<24x128xf32> to vector<3x8x128xf32>
      %cst_10 = arith.constant dense<0.000000e+00> : vector<8x128xf32>
      %20 = vector.multi_reduction <add>, %19, %cst_10 [0] : vector<3x8x128xf32> to vector<8x128xf32>
      %21 = arith.addf %18, %20 : vector<8x128xf32>
      %c0_11 = arith.constant 0 : index
      %c0_12 = arith.constant 0 : index
      %22 = vector.load %arg7[%c0_11, %c0_12] : memref<8x128xf32, #tpu.memory_space<vmem>>, vector<8x128xf32>
      tpu.vector_store %arg7[%c0_11, %c0_12], %21 {strides = array<i32>} : memref<8x128xf32, #tpu.memory_space<vmem>>, vector<8x128xf32>,
    } else {
    }
    %c0_i32_5 = arith.constant 0 : i32
    %11 = arith.cmpi eq, %arg1, %c0_i32_5 : i32
    %12 = arith.extui %11 : i1 to i32
    %c0_i32_6 = arith.constant 0 : i32
    %13 = arith.cmpi ne, %12, %c0_i32_6 : i32
    scf.if %13 {
      %c0 = arith.constant 0 : index
      %c0_7 = arith.constant 0 : index
      %14 = vector.load %arg6[%c0, %c0_7] : memref<8x128xf32, #tpu.memory_space<vmem>>, vector<8x128xf32>
      %cst = arith.constant dense<0.000000e+00> : vector<128xf32>
      %15 = vector.multi_reduction <add>, %14, %cst [0] : vector<8x128xf32> to vector<128xf32>
      %16 = vector.shape_cast %15 : vector<128xf32> to vector<1x128xf32>
      %17 = vector.shape_cast %16 : vector<1x128xf32> to vector<1x1x128xf32>
      %c0_8 = arith.constant 0 : index
      %c0_9 = arith.constant 0 : index
      %c0_10 = arith.constant 0 : index
      %18 = vector.load %arg4[%c0_8, %c0_9, %c0_10] : memref<1x1x128xf32, #tpu.memory_space<vmem>>, vector<1x1x128xf32>
      tpu.vector_store %arg4[%c0_8, %c0_9, %c0_10], %17 {strides = array<i32>} : memref<1x1x128xf32, #tpu.memory_space<vmem>>, vector<1x1x128xf32>,
      %c0_11 = arith.constant 0 : index
      %c0_12 = arith.constant 0 : index
      %19 = vector.load %arg7[%c0_11, %c0_12] : memref<8x128xf32, #tpu.memory_space<vmem>>, vector<8x128xf32>
      %cst_13 = arith.constant dense<0.000000e+00> : vector<128xf32>
      %20 = vector.multi_reduction <add>, %19, %cst_13 [0] : vector<8x128xf32> to vector<128xf32>
      %21 = vector.shape_cast %20 : vector<128xf32> to vector<1x128xf32>
      %22 = vector.shape_cast %21 : vector<1x128xf32> to vector<1x1x128xf32>
      %c0_14 = arith.constant 0 : index
      %c0_15 = arith.constant 0 : index
      %c0_16 = arith.constant 0 : index
      %23 = vector.load %arg5[%c0_14, %c0_15, %c0_16] : memref<1x1x128xf32, #tpu.memory_space<vmem>>, vector<1x1x128xf32>
      tpu.vector_store %arg5[%c0_14, %c0_15, %c0_16], %22 {strides = array<i32>} : memref<1x1x128xf32, #tpu.memory_space<vmem>>, vector<1x1x128xf32>,
    } else {
    }
    return
  }
  func.func @transform_0(%arg0: i32, %arg1: i32) -> (i32, i32) {
    %c1_i32 = arith.constant 1 : i32
    %0 = arith.muli %arg0, %c1_i32 : i32
    %1 = arith.addi %0, %arg1 : i32
    %c0_i32 = arith.constant 0 : i32
    %2 = arith.minsi %1, %c0_i32 : i32
    %c0_i32_0 = arith.constant 0 : i32
    %c0_i32_1 = arith.constant 0 : i32
    return %2, %c0_i32_0 : i32, i32
  }
  func.func @transform_1(%arg0: i32, %arg1: i32) -> (i32, i32) {
    %c1_i32 = arith.constant 1 : i32
    %0 = arith.muli %arg0, %c1_i32 : i32
    %1 = arith.addi %0, %arg1 : i32
    %c0_i32 = arith.constant 0 : i32
    %2 = arith.minsi %1, %c0_i32 : i32
    %c0_i32_0 = arith.constant 0 : i32
    %c0_i32_1 = arith.constant 0 : i32
    return %2, %c0_i32_0 : i32, i32
  }
  func.func @transform_2(%arg0: i32, %arg1: i32) -> (i32, i32, i32) {
    %c0_i32 = arith.constant 0 : i32
    %c0_i32_0 = arith.constant 0 : i32
    %c0_i32_1 = arith.constant 0 : i32
    return %arg0, %c0_i32, %c0_i32_0 : i32, i32, i32
  }
  func.func @transform_3(%arg0: i32, %arg1: i32) -> (i32, i32, i32) {
    %c0_i32 = arith.constant 0 : i32
    %c0_i32_0 = arith.constant 0 : i32
    %c0_i32_1 = arith.constant 0 : i32
    return %arg0, %c0_i32, %c0_i32_0 : i32, i32, i32
  }
}

</mosaic_0001>

<llo_original>
// kernel: tpu_custom_call.1
$region0: #{tpu_custom_call.1}
  #allocation0 [shape = 'u32[]', space=smem, size = 0x4, offset = 0x4, fixed_abs, tag = 'smem constant byte address 0x4 - core index']
  #allocation1 [shape = 'u32[72,128]{1,0:T(1,128)}', space=vmem, size = 0x9000, scoped, tag = 'internal scratch']
  #allocation2 [shape = 'f32[8,128]{1,0:T(8,128)}', space=vmem, size = 0x1000, scoped, tag = 'scratch operand']
  #allocation3 [shape = 'f32[8,128]{1,0:T(8,128)}', space=vmem, size = 0x1000, scoped, tag = 'scratch operand']
  %s0 = inlined_call_operand.hbm [shape: f32[16,128], index: 0, kind: input, shape index: {}]
  %s1 = inlined_call_operand.hbm [shape: f32[24,128], index: 1, kind: input, shape index: {}]
  %s2 = inlined_call_operand.hbm [shape: f32[1,1,128], index: 2, kind: output, shape index: {0}]
  %s3 = inlined_call_operand.hbm [shape: f32[1,1,128], index: 3, kind: output, shape index: {1}]
  %4 = xla_tuple %s2, %s3
  %s5 = sld [smem:[#allocation0]]
  $region46: #{tpu_custom_call.1} parent=0
    _
  %s7 = ssub.s32 1, %s5
  %s8 = scalar_select 0, %s7, %s5
  $region1: #{tpu_custom_call.1} parent=0
    #allocation4 [shape = 'u8[8192]{0}', space=vmem, size = 0x2000, scoped, tag = 'input window, operand 0, single buffered']
    #allocation5 [shape = 's32[1]{0}', space=sflag, size = 0x4, scoped, tag = 'scoped memory for tpu_custom_call.1']
    #allocation6 [shape = 's32[1]{0}', space=sflag, size = 0x4, scoped, tag = 'scoped memory for tpu_custom_call.1']
    #allocation7 [shape = 'u8[12288]{0}', space=vmem, size = 0x3000, scoped, tag = 'input window, operand 1, single buffered']
    #allocation8 [shape = 's32[1]{0}', space=sflag, size = 0x4, scoped, tag = 'scoped memory for tpu_custom_call.1']
    #allocation9 [shape = 'u8[512]{0}', space=vmem, size = 0x400, scoped, tag = 'output window, operand 0, single buffered']
    #allocation10 [shape = 'u8[512]{0}', space=vmem, size = 0x400, scoped, tag = 'output window, operand 1, single buffered']
    #allocation11 [shape = 's32[1]{0}', space=sflag, size = 0x4, scoped, tag = 'scoped memory for tpu_custom_call.1']
    %9 = vsyncpa [#allocation5], 0
    %10 = vsyncpa [#allocation8], 0
    %11 = vsyncpa [#allocation6], 0
    %12 = vsyncpa [#allocation11], 0
    // Predicated region
    $region2: #{tpu_custom_call.1} parent=1 // pred_check
      _
    $region3: #{tpu_custom_call.1} parent=1 // pred_check_branch
      %14 = sbr.rel (0) target = $region5
    $region4: #{tpu_custom_call.1} parent=1 // pred_region
      %s15 = sadd.s32 0, 0
      %p16 = scmp.lt.s32.totalorder %s15, 0
      %s17 = scalar_select %p16, %s15, 0
      %s18 = smul.u32 2, %s17
      %20 = vsyncadd [#allocation5], 0
      %s21 = smul.addr %s18, 8
      %s22 = scalar_lea.hbm %s0, %s21
      %s23 = sshll.u32 %s22, 4
      %s24 = int_to_ptr.hbm [resolvable:$true] %s23
      %s25 = sshll.u32 [#allocation4], 4
      %s26 = int_to_ptr.vmem [resolvable:$true] %s25
      %31 = dma.hbm_to_vmem [thread:$0]  %s24, 256, %s26, [#allocation5], 128, 128, 8
    $region5: #{tpu_custom_call.1} parent=1 // pred_fallthru
      _
    // Predicated region
    $region6: #{tpu_custom_call.1} parent=1 // pred_check
      _
    $region7: #{tpu_custom_call.1} parent=1 // pred_check_branch
      %33 = sbr.rel (0) target = $region9
    $region8: #{tpu_custom_call.1} parent=1 // pred_region
      %s34 = sadd.s32 0, 0
      %p35 = scmp.lt.s32.totalorder %s34, 0
      %s36 = scalar_select %p35, %s34, 0
      %s37 = smul.u32 3, %s36
      %39 = vsyncadd [#allocation8], 0
      %s40 = smul.addr %s37, 8
      %s41 = scalar_lea.hbm %s1, %s40
      %s42 = sshll.u32 %s41, 4
      %s43 = int_to_ptr.hbm [resolvable:$true] %s42
      %s44 = sshll.u32 [#allocation7], 4
      %s45 = int_to_ptr.vmem [resolvable:$true] %s44
      %50 = dma.hbm_to_vmem [thread:$0]  %s43, 384, %s45, [#allocation8], 128, 128, 8
    $region9: #{tpu_custom_call.1} parent=1 // pred_fallthru
      _
    // Predicated region
    $region10: #{tpu_custom_call.1} parent=1 // pred_check
      _
    $region11: #{tpu_custom_call.1} parent=1 // pred_check_branch
      %52 = sbr.rel (0) target = $region13
    $region12: #{tpu_custom_call.1} parent=1 // pred_region
      %54 = dma.done [#allocation5], 256
    $region13: #{tpu_custom_call.1} parent=1 // pred_fallthru
      _
    // Predicated region
    $region14: #{tpu_custom_call.1} parent=1 // pred_check
      _
    $region15: #{tpu_custom_call.1} parent=1 // pred_check_branch
      %56 = sbr.rel (0) target = $region17
    $region16: #{tpu_custom_call.1} parent=1 // pred_region
      %58 = dma.done [#allocation8], 384
    $region17: #{tpu_custom_call.1} parent=1 // pred_fallthru
      _
    %s59 = sadd.s32 0, 0
    %p60 = scmp.lt.s32.totalorder %s59, 0
    %s61 = scalar_select %p60, %s59, 0
    %s62 = smul.u32 2, %s61
    %s63 = sadd.s32 0, 0
    %p64 = scmp.lt.s32.totalorder %s63, 0
    %s65 = scalar_select %p64, %s63, 0
    %s66 = smul.u32 3, %s65
    %s67 = sadd.s32 0, 0
    %p68 = scmp.eq.s32.totalorder 0, 0
    // Predicated region
    $region18: #{tpu_custom_call.1} parent=1 // pred_check
      %p69 = pneg %p68
    $region19: #{tpu_custom_call.1} parent=1 // pred_check_branch
      %71 = sbr.rel (%p69) target = $region21
    $region20: #{tpu_custom_call.1} parent=1 // pred_region
      %72 = vst [vmem:[#allocation2] sm:$0xff] 0.0
      %73 = vst [vmem:[#allocation3] sm:$0xff] 0.0
    $region21: #{tpu_custom_call.1} parent=1 // pred_fallthru
      _
    %p74 = scmp.le.s32.totalorder %s67, 0
    // Predicated region
    $region22: #{tpu_custom_call.1} parent=1 // pred_check
      %p75 = pneg %p74
    $region23: #{tpu_custom_call.1} parent=1 // pred_check_branch
      %77 = sbr.rel (%p75) target = $region25
    $region24: #{tpu_custom_call.1} parent=1 // pred_region
      %v78 = vld [vmem:[#allocation4] sm:$0xff]
      %v79 = vld [vmem:[#allocation4 + $0x8] sm:$0xff]
      %v80 = vmul.f32 %v78, 0.5
      %v81 = vmul.f32 %v79, 0.5
      %v82 = vtanh.pop %v80
      %v83 = vtanh.pop %v81
      %v84 = vld [vmem:[#allocation2] sm:$0xff]
      %v85 = vadd.f32 %v82, %v83
      %v86 = vadd.f32 %v84, %v85
      %87 = vst [vmem:[#allocation2] sm:$0xff] %v86
      %v88 = vld [vmem:[#allocation7] sm:$0xff]
      %v89 = vld [vmem:[#allocation7 + $0x8] sm:$0xff]
      %v90 = vld [vmem:[#allocation7 + $0x10] sm:$0xff]
      %v91 = vmul.f32 %v88, 0.5
      %v92 = vmul.f32 %v89, 0.5
      %v93 = vmul.f32 %v90, 0.5
      %v94 = vtanh.pop %v91
      %v95 = vtanh.pop %v92
      %v96 = vtanh.pop %v93
      %v97 = vld [vmem:[#allocation3] sm:$0xff]
      %v98 = vadd.f32 %v94, %v95
      %v99 = vadd.f32 %v98, %v96
      %v100 = vadd.f32 %v97, %v99
      %101 = vst [vmem:[#allocation3] sm:$0xff] %v100
    $region25: #{tpu_custom_call.1} parent=1 // pred_fallthru
      _
    // Predicated region
    $region26: #{tpu_custom_call.1} parent=1 // pred_check
      %p102 = pneg %p68
    $region27: #{tpu_custom_call.1} parent=1 // pred_check_branch
      %104 = sbr.rel (%p102) target = $region29
    $region28: #{tpu_custom_call.1} parent=1 // pred_region
      %v105 = vld [vmem:[#allocation2] sm:$0xff]
      %v106 = vrot.slane %v105, 4
      %v107 = vadd.f32 %v105, %v106
      %v108 = vrot.slane %v107, 2
      %v109 = vadd.f32 %v107, %v108
      %v110 = vrot.slane %v109, 1
      %v111 = vadd.f32 %v109, %v110
      %112 = vst [vmem:[#allocation9] sm:$0x1] %v111
      %v113 = vld [vmem:[#allocation3] sm:$0xff]
      %v114 = vrot.slane %v113, 4
      %v115 = vadd.f32 %v113, %v114
      %v116 = vrot.slane %v115, 2
      %v117 = vadd.f32 %v115, %v116
      %v118 = vrot.slane %v117, 1
      %v119 = vadd.f32 %v117, %v118
      %120 = vst [vmem:[#allocation10] sm:$0x1] %v119
    $region29: #{tpu_custom_call.1} parent=1 // pred_fallthru
      _
    // Predicated region
    $region30: #{tpu_custom_call.1} parent=1 // pred_check
      _
    $region31: #{tpu_custom_call.1} parent=1 // pred_check_branch
      %122 = sbr.rel (0) target = $region33
    $region32: #{tpu_custom_call.1} parent=1 // pred_region
      %124 = vsyncadd [#allocation6], 0
      %s126 = sshll.u32 [#allocation9], 4
      %s127 = int_to_ptr.vmem [resolvable:$true] %s126
      %s128 = sshll.u32 %s2, 4
      %s129 = int_to_ptr.hbm [resolvable:$true] %s128
      %131 = dma.vmem_to_hbm [thread:$0]  %s127, 16, %s129, [#allocation6]
    $region33: #{tpu_custom_call.1} parent=1 // pred_fallthru
      _
    // Predicated region
    $region34: #{tpu_custom_call.1} parent=1 // pred_check
      _
    $region35: #{tpu_custom_call.1} parent=1 // pred_check_branch
      %133 = sbr.rel (0) target = $region37
    $region36: #{tpu_custom_call.1} parent=1 // pred_region
      %135 = vsyncadd [#allocation11], 0
      %s137 = sshll.u32 [#allocation10], 4
      %s138 = int_to_ptr.vmem [resolvable:$true] %s137
      %s139 = sshll.u32 %s3, 4
      %s140 = int_to_ptr.hbm [resolvable:$true] %s139
      %142 = dma.vmem_to_hbm [thread:$0]  %s138, 16, %s140, [#allocation11]
    $region37: #{tpu_custom_call.1} parent=1 // pred_fallthru
      _
    // Predicated region
    $region38: #{tpu_custom_call.1} parent=1 // pred_check
      _
    $region39: #{tpu_custom_call.1} parent=1 // pred_check_branch
      %144 = sbr.rel (0) target = $region41
    $region40: #{tpu_custom_call.1} parent=1 // pred_region
      %146 = dma.done [#allocation6], 16
    $region41: #{tpu_custom_call.1} parent=1 // pred_fallthru
      _
    // Predicated region
    $region42: #{tpu_custom_call.1} parent=1 // pred_check
      _
    $region43: #{tpu_custom_call.1} parent=1 // pred_check_branch
      %148 = sbr.rel (0) target = $region45
    $region44: #{tpu_custom_call.1} parent=1 // pred_region
      %150 = dma.done [#allocation11], 16
    $region45: #{tpu_custom_call.1} parent=1 // pred_fallthru
      _
    %151 = vsyncpa [#allocation5], 1
    %152 = vsyncpa [#allocation8], 1
    %153 = vsyncpa [#allocation6], 1
    %154 = vsyncpa [#allocation11], 1

</llo_original>
